<compile_context>
chip_gen: v6e
topology: v6e:2x2x1
jax: 0.10.0
libtpu: 0.0.40
codegen_flags: <defaults>
</compile_context>

<pallas_src>
import jax
import jax.numpy as jnp
from jax.experimental import pallas as pl
from jax.experimental.pallas import tpu as pltpu


def projhead_kernel(x_ref, w1_ref, b1_ref, w2_ref, b2_ref, o_ref):
    # x_ref:  (tm, indim)      bf16 (compute dtype)
    # w1_ref: (indim, outdim)  bf16 (resident)
    # b1_ref: (1, outdim)      f32
    # w2_ref: (outdim, outdim) bf16 (resident)
    # b2_ref: (1, outdim)      f32
    # o_ref:  (tm, outdim)     f32
    # Matmul 1: bf16 operands, f32 MXU accumulation.
    h = jnp.dot(x_ref[...], w1_ref[...], preferred_element_type=jnp.float32)
    # Epilogue in f32 vregs (bias + ReLU) -- VPU filler hidden under MXU latency.
    h = jnp.maximum(h + b1_ref[...], 0.0)
    # Back to bf16 operands for the second MXU pass, still f32 accumulate.
    o = jnp.dot(h.astype(w2_ref.dtype), w2_ref[...],
                preferred_element_type=jnp.float32)
    o_ref[...] = (o + b2_ref[...]).astype(o_ref.dtype)


def _round_up(a: int, m: int) -> int:
    return (a + m - 1) // m * m


def proj_head(x, w1, b1, w2, b2, *, tm=512, compute_dtype=jnp.bfloat16):
    """Fused ProjHead forward. x: [B, indim] -> [B, outdim] float32.

    Weights stored transposed vs. PyTorch: w1 [indim, outdim], w2 [outdim, outdim].
    """
    B, indim = x.shape
    outdim = w1.shape[1]
    assert w1.shape == (indim, outdim)
    assert w2.shape == (outdim, outdim)

    # --- operand prep: bf16 matmul operands, f32 biases ---------------------
    xc = x.astype(compute_dtype)
    w1c = w1.astype(compute_dtype)
    w2c = w2.astype(compute_dtype)
    b1c = b1.reshape(1, outdim).astype(jnp.float32)
    b2c = b2.reshape(1, outdim).astype(jnp.float32)

    # --- row tile + batch padding (no divisibility assert) ------------------
    SUB = 16                                   # safe sublane multiple for bf16/f32 blocks
    tm = max(SUB, _round_up(tm, SUB))
    tm_eff = min(tm, _round_up(B, SUB))
    Bp = _round_up(B, tm_eff)
    if Bp != B:
        xc = jnp.pad(xc, ((0, Bp - B), (0, 0)))   # zero rows -> harmless extra work
    grid = (Bp // tm_eff,)                     # >=2 steps once B > tm (megacore/2-TC)

    # --- cost estimate (helps XLA schedule around the custom call) ----------
    itm = jnp.dtype(compute_dtype).itemsize
    flops = 2 * Bp * indim * outdim + 2 * Bp * outdim * outdim
    bytes_accessed = (Bp * indim * itm                      # x
                      + indim * outdim * itm                # w1
                      + outdim * outdim * itm               # w2
                      + 2 * outdim * 4                      # biases
                      + Bp * outdim * 4)                    # out
    cost = pl.CostEstimate(flops=flops, transcendentals=0,
                           bytes_accessed=bytes_accessed)

    # --- VMEM budget: double-buffered x/out tiles + resident weights --------
    vmem_bytes = (2 * tm_eff * indim * itm
                  + 2 * tm_eff * outdim * 4
                  + 2 * (indim * outdim + outdim * outdim) * itm
                  + 4 * outdim * 4)
    vmem_limit = min(128 << 20, max(32 << 20, int(vmem_bytes * 3 // 2) + (4 << 20)))
    # TODO(synk): on v7x (64 MiB VMEM), add a K grid axis over indim with an f32
    # accumulator scratch if the resident-weight footprint above exceeds ~24 MiB,
    # and single-buffer the weight specs (pipeline_mode=pl.Buffered(1)).

    out = pl.pallas_call(
        projhead_kernel,
        out_shape=jax.ShapeDtypeStruct((Bp, outdim), jnp.float32),
        grid_spec=pltpu.PrefetchScalarGridSpec(
            num_scalar_prefetch=0,
            grid=grid,
            in_specs=[
                pl.BlockSpec((tm_eff, indim), lambda i: (i, 0)),    # x tile
                pl.BlockSpec((indim, outdim), lambda i: (0, 0)),    # w1 (resident)
                pl.BlockSpec((1, outdim), lambda i: (0, 0)),        # b1
                pl.BlockSpec((outdim, outdim), lambda i: (0, 0)),   # w2 (resident)
                pl.BlockSpec((1, outdim), lambda i: (0, 0)),        # b2
            ],
            out_specs=pl.BlockSpec((tm_eff, outdim), lambda i: (i, 0)),
        ),
        compiler_params=pltpu.CompilerParams(
            dimension_semantics=("parallel",),
            vmem_limit_bytes=vmem_limit,
        ),
        cost_estimate=cost,
    )(xc, w1c, b1c, w2c, b2c)

    return out[:B] if Bp != B else out


def reference_f32(x, w1, b1, w2, b2):
    """PyTorch-semantics full-f32 reference."""
    x = x.astype(jnp.float32)
    h = jnp.maximum(x @ w1 + b1, 0.0)
    return h @ w2 + b2


def reference_bf16(x, w1, b1, w2, b2, compute_dtype=jnp.bfloat16):
    """Reference mirroring the kernel's bf16-operand / f32-accumulate recipe."""
    xb = x.astype(compute_dtype)
    w1b = w1.astype(compute_dtype)
    w2b = w2.astype(compute_dtype)
    h = jnp.dot(xb, w1b, preferred_element_type=jnp.float32) + b1
    h = jnp.maximum(h, 0.0)
    return jnp.dot(h.astype(compute_dtype), w2b,
                   preferred_element_type=jnp.float32) + b2


if __name__ == "__main__":
    # Small shapes consistent with ProjHead(indim, outdim).
    # B=200 is deliberately NOT tile-aligned to exercise the padding / cdiv path.
    B, INDIM, OUTDIM = 200, 512, 128

    key = jax.random.PRNGKey(0)
    kx, k1, k2, k3, k4 = jax.random.split(key, 5)

    x = jax.random.normal(kx, (B, INDIM), dtype=jnp.float32)

    # Deterministic PyTorch-Linear-like uniform init, stored transposed.
    lim1 = 1.0 / jnp.sqrt(INDIM)
    lim2 = 1.0 / jnp.sqrt(OUTDIM)
    w1 = jax.random.uniform(k1, (INDIM, OUTDIM), jnp.float32, -lim1, lim1)
    b1 = jax.random.uniform(k2, (OUTDIM,), jnp.float32, -lim1, lim1)
    w2 = jax.random.uniform(k3, (OUTDIM, OUTDIM), jnp.float32, -lim2, lim2)
    b2 = jax.random.uniform(k4, (OUTDIM,), jnp.float32, -lim2, lim2)

    # tm=128 here => padded batch 256, 2 grid steps (multi-step pipeline exercised).
    out = proj_head(x, w1, b1, w2, b2, tm=128)
    out = jax.block_until_ready(out)
    assert out.shape == (B, OUTDIM)

    # Tight check against a reference using the same bf16-operand recipe.
    ref_b = reference_bf16(x, w1, b1, w2, b2)
    assert jnp.allclose(out, ref_b, atol=1e-2, rtol=1e-2), "mismatch vs bf16 reference"

    # Loose check against the full-f32 PyTorch-semantics reference.
    ref_f = reference_f32(x, w1, b1, w2, b2)
    assert jnp.allclose(out, ref_f, atol=5e-2, rtol=5e-2), "mismatch vs f32 reference"

    print("KERNEL_OK")
</pallas_src>

<mosaic_0001>
module attributes {stable_mosaic.version = 11 : i64} {
  func.func @projhead_kernel(%arg0: i32, %arg1: memref<128x512xbf16, #tpu.memory_space<vmem>>, %arg2: memref<512x128xbf16, #tpu.memory_space<vmem>>, %arg3: memref<1x128xf32, #tpu.memory_space<vmem>>, %arg4: memref<128x128xbf16, #tpu.memory_space<vmem>>, %arg5: memref<1x128xf32, #tpu.memory_space<vmem>>, %arg6: memref<128x128xf32, #tpu.memory_space<vmem>>) attributes {dimension_semantics = [#tpu.dimension_semantics<parallel>], iteration_bounds = array<i64: 2>, scalar_prefetch = 0 : i64, scratch_operands = 0 : i64, tpu.core_type = #tpu.core_type<tc>, window_params = [{transform_indices = @transform_0, window_bounds = array<i64: 128, 512>}, {pipeline_mode = #tpu.pipeline_mode<synchronous>, transform_indices = @transform_1, window_bounds = array<i64: 512, 128>}, {pipeline_mode = #tpu.pipeline_mode<synchronous>, transform_indices = @transform_2, window_bounds = array<i64: 1, 128>}, {pipeline_mode = #tpu.pipeline_mode<synchronous>, transform_indices = @transform_3, window_bounds = array<i64: 128, 128>}, {pipeline_mode = #tpu.pipeline_mode<synchronous>, transform_indices = @transform_4, window_bounds = array<i64: 1, 128>}, {transform_indices = @transform_5, window_bounds = array<i64: 128, 128>}]} {
    %c0 = arith.constant 0 : index
    %c0_0 = arith.constant 0 : index
    %0 = vector.load %arg1[%c0, %c0_0] : memref<128x512xbf16, #tpu.memory_space<vmem>>, vector<128x512xbf16>
    %c0_1 = arith.constant 0 : index
    %c0_2 = arith.constant 0 : index
    %1 = vector.load %arg2[%c0_1, %c0_2] : memref<512x128xbf16, #tpu.memory_space<vmem>>, vector<512x128xbf16>
    %cst = arith.constant dense<0.000000e+00> : vector<128x128xf32>
    %2 = tpu.matmul %0, %1, %cst {dimension_numbers = #tpu.dot_dimension_numbers<[1], [0], [0], [1], [0, 0, 1, 1], [], []>} : vector<128x512xbf16>, vector<512x128xbf16>, vector<128x128xf32> -> vector<128x128xf32>
    %c0_3 = arith.constant 0 : index
    %c0_4 = arith.constant 0 : index
    %3 = vector.load %arg3[%c0_3, %c0_4] : memref<1x128xf32, #tpu.memory_space<vmem>>, vector<1x128xf32>
    %4 = vector.broadcast %3 : vector<1x128xf32> to vector<128x128xf32>
    %5 = arith.addf %2, %4 : vector<128x128xf32>
    %cst_5 = arith.constant 0.000000e+00 : f32
    %6 = vector.broadcast %cst_5 : f32 to vector<128x128xf32>
    %7 = arith.maximumf %5, %6 : vector<128x128xf32>
    %8 = arith.truncf %7 : vector<128x128xf32> to vector<128x128xbf16>
    %c0_6 = arith.constant 0 : index
    %c0_7 = arith.constant 0 : index
    %9 = vector.load %arg4[%c0_6, %c0_7] : memref<128x128xbf16, #tpu.memory_space<vmem>>, vector<128x128xbf16>
    %cst_8 = arith.constant dense<0.000000e+00> : vector<128x128xf32>
    %10 = tpu.matmul %8, %9, %cst_8 {dimension_numbers = #tpu.dot_dimension_numbers<[1], [0], [0], [1], [0, 0, 1, 1], [], []>} : vector<128x128xbf16>, vector<128x128xbf16>, vector<128x128xf32> -> vector<128x128xf32>
    %c0_9 = arith.constant 0 : index
    %c0_10 = arith.constant 0 : index
    %11 = vector.load %arg5[%c0_9, %c0_10] : memref<1x128xf32, #tpu.memory_space<vmem>>, vector<1x128xf32>
    %12 = vector.broadcast %11 : vector<1x128xf32> to vector<128x128xf32>
    %13 = arith.addf %10, %12 : vector<128x128xf32>
    %c0_11 = arith.constant 0 : index
    %c0_12 = arith.constant 0 : index
    %14 = vector.load %arg6[%c0_11, %c0_12] : memref<128x128xf32, #tpu.memory_space<vmem>>, vector<128x128xf32>
    tpu.vector_store %arg6[%c0_11, %c0_12], %13 {strides = array<i32>} : memref<128x128xf32, #tpu.memory_space<vmem>>, vector<128x128xf32>,
    return
  }
  func.func @transform_0(%arg0: i32) -> (i32, i32) {
    %c0_i32 = arith.constant 0 : i32
    %c0_i32_0 = arith.constant 0 : i32
    return %arg0, %c0_i32 : i32, i32
  }
  func.func @transform_1(%arg0: i32) -> (i32, i32) {
    %c0_i32 = arith.constant 0 : i32
    %c0_i32_0 = arith.constant 0 : i32
    %c0_i32_1 = arith.constant 0 : i32
    return %c0_i32, %c0_i32_0 : i32, i32
  }
  func.func @transform_2(%arg0: i32) -> (i32, i32) {
    %c0_i32 = arith.constant 0 : i32
    %c0_i32_0 = arith.constant 0 : i32
    %c0_i32_1 = arith.constant 0 : i32
    return %c0_i32, %c0_i32_0 : i32, i32
  }
  func.func @transform_3(%arg0: i32) -> (i32, i32) {
    %c0_i32 = arith.constant 0 : i32
    %c0_i32_0 = arith.constant 0 : i32
    %c0_i32_1 = arith.constant 0 : i32
    return %c0_i32, %c0_i32_0 : i32, i32
  }
  func.func @transform_4(%arg0: i32) -> (i32, i32) {
    %c0_i32 = arith.constant 0 : i32
    %c0_i32_0 = arith.constant 0 : i32
    %c0_i32_1 = arith.constant 0 : i32
    return %c0_i32, %c0_i32_0 : i32, i32
  }
  func.func @transform_5(%arg0: i32) -> (i32, i32) {
    %c0_i32 = arith.constant 0 : i32
    %c0_i32_0 = arith.constant 0 : i32
    return %arg0, %c0_i32 : i32, i32
  }
}

</mosaic_0001>

<llo_original>
// kernel: tpu_custom_call.1
$region0: #{tpu_custom_call.1}
  #allocation0 [shape = 'u32[]', space=smem, size = 0x4, offset = 0x4, fixed_abs, tag = 'smem constant byte address 0x4 - core index']
  #allocation1 [shape = 'u32[144,128]{1,0:T(1,128)}', space=vmem, size = 0x12000, scoped, tag = 'internal scratch']
  %s0 = inlined_call_operand.hbm [shape: bf16[256,512], index: 0, kind: input, shape index: {}]
  %s1 = inlined_call_operand.hbm [shape: bf16[512,128], index: 1, kind: input, shape index: {}]
  %s2 = inlined_call_operand.vmem [shape: f32[1,128], index: 2, kind: input, shape index: {}]
  %s3 = inlined_call_operand.hbm [shape: bf16[128,128], index: 3, kind: input, shape index: {}]
  %s4 = inlined_call_operand.vmem [shape: f32[1,128], index: 4, kind: input, shape index: {}]
  %s5 = inlined_call_operand.hbm [shape: f32[256,128], index: 5, kind: output, shape index: {}]
  %s6 = sld [smem:[#allocation0]]
  $region65: #{tpu_custom_call.1} parent=0
    _
  %s8 = ssub.s32 1, %s6
  %s9 = scalar_select 0, %s8, %s6
  $region1: #{tpu_custom_call.1} parent=0
    #allocation2 [shape = 'u8[262144]{0}', space=vmem, size = 0x40000, scoped, tag = 'input window, operand 0']
    #allocation3 [shape = 's32[2]{0}', space=sflag, size = 0x8, scoped, tag = 'scoped memory for tpu_custom_call.1']
    #allocation4 [shape = 's32[2]{0}', space=sflag, size = 0x8, scoped, tag = 'scoped memory for tpu_custom_call.1']
    #allocation5 [shape = 'u8[131072]{0}', space=vmem, size = 0x20000, scoped, tag = 'input window, operand 1, single buffered']
    #allocation6 [shape = 's32[1]{0}', space=sflag, size = 0x4, scoped, tag = 'scoped memory for tpu_custom_call.1']
    #allocation7 [shape = 'u8[32768]{0}', space=vmem, size = 0x8000, scoped, tag = 'input window, operand 3, single buffered']
    #allocation8 [shape = 'u8[131072]{0}', space=vmem, size = 0x20000, scoped, tag = 'output window, operand 0']
    %10 = vsyncpa [#allocation3], 0
    %s11 = scalar_lea.sflag [#allocation3], 1
    %12 = vsyncpa %s11, 0
    %13 = vsyncpa [#allocation6], 0
    %14 = vsyncpa [#allocation4], 0
    %s15 = scalar_lea.sflag [#allocation4], 1
    %16 = vsyncpa %s15, 0
    loop: start=0, step=1, limit=4
    $region2: #{tpu_custom_call.1} parent=1 // loop_pre_header
      _
    $region3: #{tpu_custom_call.1} parent=1 // loop_header
      %s18 = sphi 0, %s22
      %p19 = scmp.ge.s32.totalorder %s18, 4
      %s28 = sphi 0, %s30
      %s31 = sphi 0, %s28
      %s32 = sphi 0, %s31
      %s48 = sphi 0, %s32
      %s52 = sphi 0, %s52
      %s54 = sphi 0, %s52
      %s55 = sphi 0, %s54
      %s69 = sphi 0, %s55
      %s73 = sphi 0, %s73
      %s75 = sphi 0, %s73
      %s76 = sphi 0, %s75
      %s90 = sphi 0, %s76
      %s94 = sphi 0, %s94
      %s96 = sphi 0, %s94
      %s97 = sphi 0, %s96
      %s111 = sphi 0, %s97
      %s115 = sphi 0, %s115
      %s117 = sphi 0, %s115
      %s118 = sphi 0, %s117
      %s132 = sphi 0, %s118
      %s138 = sphi 0, %s140
      %s141 = sphi 0, %s138
      %s142 = sphi 0, %s141
      %s158 = sphi 0, %s142
    $region4: #{tpu_custom_call.1} parent=1 // loop_header_branch
      %21 = sbr.rel (%p19) target = $region8
    $region5: #{tpu_custom_call.1} parent=1 // loop_body
      %s23 = ssub.s32 %s18, 1
      %s24 = ssub.s32 %s18, 2
      %s25 = sadd.s32 %s18, 1
      %s26 = ssub.s32 %s18, %s25
      %p27 = scmp.eq.s32.totalorder %s26, 0
      %s29 = sadd.s32 %s28, 1
      %s30 = scalar_select %p27, %s28, %s29
      %p33 = pneg %p27
      %p34 = scmp.eq.s32.totalorder %s18, 1
      %p35 = por %p33, %p34
      %p36 = scmp.ne.s32.totalorder %s28, %s31
      %p37 = scmp.eq.s32.totalorder %s18, 0
      %p38 = por %p36, %p37
      %p39 = scmp.ne.s32.totalorder %s28, %s31
      %p40 = scmp.eq.s32.totalorder %s23, 1
      %p41 = por %p39, %p40
      %p42 = scmp.ne.s32.totalorder %s31, %s32
      %p43 = scmp.eq.s32.totalorder %s23, 0
      %p44 = por %p42, %p43
      %p45 = scmp.ne.s32.totalorder %s31, %s32
      %p46 = scmp.eq.s32.totalorder %s24, 1
      %p47 = por %p45, %p46
      %p49 = scmp.ne.s32.totalorder %s32, %s48
      %p50 = scmp.eq.s32.totalorder %s24, 0
      %p51 = por %p49, %p50
      %s53 = sadd.s32 %s52, 1
      %p56 = scmp.eq.s32.totalorder %s18, 1
      %p57 = scmp.ne.s32.totalorder %s52, %s54
      %p58 = scmp.eq.s32.totalorder %s18, 0
      %p59 = por %p57, %p58
      %p60 = scmp.ne.s32.totalorder %s52, %s54
      %p61 = scmp.eq.s32.totalorder %s23, 1
      %p62 = por %p60, %p61
      %p63 = scmp.ne.s32.totalorder %s54, %s55
      %p64 = scmp.eq.s32.totalorder %s23, 0
      %p65 = por %p63, %p64
      %p66 = scmp.ne.s32.totalorder %s54, %s55
      %p67 = scmp.eq.s32.totalorder %s24, 1
      %p68 = por %p66, %p67
      %p70 = scmp.ne.s32.totalorder %s55, %s69
      %p71 = scmp.eq.s32.totalorder %s24, 0
      %p72 = por %p70, %p71
      %s74 = sadd.s32 %s73, 1
      %p77 = scmp.eq.s32.totalorder %s18, 1
      %p78 = scmp.ne.s32.totalorder %s73, %s75
      %p79 = scmp.eq.s32.totalorder %s18, 0
      %p80 = por %p78, %p79
      %p81 = scmp.ne.s32.totalorder %s73, %s75
      %p82 = scmp.eq.s32.totalorder %s23, 1
      %p83 = por %p81, %p82
      %p84 = scmp.ne.s32.totalorder %s75, %s76
      %p85 = scmp.eq.s32.totalorder %s23, 0
      %p86 = por %p84, %p85
      %p87 = scmp.ne.s32.totalorder %s75, %s76
      %p88 = scmp.eq.s32.totalorder %s24, 1
      %p89 = por %p87, %p88
      %p91 = scmp.ne.s32.totalorder %s76, %s90
      %p92 = scmp.eq.s32.totalorder %s24, 0
      %p93 = por %p91, %p92
      %s95 = sadd.s32 %s94, 1
      %p98 = scmp.eq.s32.totalorder %s18, 1
      %p99 = scmp.ne.s32.totalorder %s94, %s96
      %p100 = scmp.eq.s32.totalorder %s18, 0
      %p101 = por %p99, %p100
      %p102 = scmp.ne.s32.totalorder %s94, %s96
      %p103 = scmp.eq.s32.totalorder %s23, 1
      %p104 = por %p102, %p103
      %p105 = scmp.ne.s32.totalorder %s96, %s97
      %p106 = scmp.eq.s32.totalorder %s23, 0
      %p107 = por %p105, %p106
      %p108 = scmp.ne.s32.totalorder %s96, %s97
      %p109 = scmp.eq.s32.totalorder %s24, 1
      %p110 = por %p108, %p109
      %p112 = scmp.ne.s32.totalorder %s97, %s111
      %p113 = scmp.eq.s32.totalorder %s24, 0
      %p114 = por %p112, %p113
      %s116 = sadd.s32 %s115, 1
      %p119 = scmp.eq.s32.totalorder %s18, 1
      %p120 = scmp.ne.s32.totalorder %s115, %s117
      %p121 = scmp.eq.s32.totalorder %s18, 0
      %p122 = por %p120, %p121
      %p123 = scmp.ne.s32.totalorder %s115, %s117
      %p124 = scmp.eq.s32.totalorder %s23, 1
      %p125 = por %p123, %p124
      %p126 = scmp.ne.s32.totalorder %s117, %s118
      %p127 = scmp.eq.s32.totalorder %s23, 0
      %p128 = por %p126, %p127
      %p129 = scmp.ne.s32.totalorder %s117, %s118
      %p130 = scmp.eq.s32.totalorder %s24, 1
      %p131 = por %p129, %p130
      %p133 = scmp.ne.s32.totalorder %s118, %s132
      %p134 = scmp.eq.s32.totalorder %s24, 0
      %p135 = por %p133, %p134
      %s136 = ssub.s32 %s18, %s25
      %p137 = scmp.eq.s32.totalorder %s136, 0
      %s139 = sadd.s32 %s138, 1
      %s140 = scalar_select %p137, %s138, %s139
      %p143 = pneg %p137
      %p144 = scmp.eq.s32.totalorder %s18, 1
      %p145 = por %p143, %p144
      %p146 = scmp.ne.s32.totalorder %s138, %s141
      %p147 = scmp.eq.s32.totalorder %s18, 0
      %p148 = por %p146, %p147
      %p149 = scmp.ne.s32.totalorder %s138, %s141
      %p150 = scmp.eq.s32.totalorder %s23, 1
      %p151 = por %p149, %p150
      %p152 = scmp.ne.s32.totalorder %s141, %s142
      %p153 = scmp.eq.s32.totalorder %s23, 0
      %p154 = por %p152, %p153
      %p155 = scmp.ne.s32.totalorder %s141, %s142
      %p156 = scmp.eq.s32.totalorder %s24, 1
      %p157 = por %p155, %p156
      %p159 = scmp.ne.s32.totalorder %s142, %s158
      %p160 = scmp.eq.s32.totalorder %s24, 0
      %p161 = por %p159, %p160
      %p162 = scmp.le.s32.totalorder 1, %s18
      %p163 = scmp.lt.s32.totalorder %s18, 3
      %p164 = pnand %p162, %p163
      %p165 = pneg %p164
      // Predicated region
      $region9: #{tpu_custom_call.1} parent=5 // pred_check
        _
      $region10: #{tpu_custom_call.1} parent=5 // pred_check_branch
        %167 = sbr.rel (%p164) target = $region12
      $region11: #{tpu_custom_call.1} parent=5 // pred_region
        %s168 = ssub.s32 %s18, 1
        // Predicated region
        $region13: #{tpu_custom_call.1} parent=11 // pred_check
          %p169 = pneg %p65
        $region14: #{tpu_custom_call.1} parent=11 // pred_check_branch
          %171 = sbr.rel (%p169) target = $region16
        $region15: #{tpu_custom_call.1} parent=11 // pred_region
          %s173 = ssub.s32 4096, 4096
          %174 = vsyncadd [#allocation6], %s173
          %s175 = sshll.u32 [#allocation5], 4
          %s176 = int_to_ptr.vmem [resolvable:$true] %s175
          %181 = dma.hbm_to_vmem [thread:$0]  %s1, 4096, %s176, [#allocation6], 64, 64, 4
        $region16: #{tpu_custom_call.1} parent=11 // pred_fallthru
          _
        // Predicated region
        $region17: #{tpu_custom_call.1} parent=11 // pred_check
          %p182 = pneg %p86
        $region18: #{tpu_custom_call.1} parent=11 // pred_check_branch
          %184 = sbr.rel (%p182) target = $region20
        $region19: #{tpu_custom_call.1} parent=11 // pred_region
          _
        $region20: #{tpu_custom_call.1} parent=11 // pred_fallthru
          _
        // Predicated region
        $region21: #{tpu_custom_call.1} parent=11 // pred_check
          %p185 = pneg %p107
        $region22: #{tpu_custom_call.1} parent=11 // pred_check_branch
          %187 = sbr.rel (%p185) target = $region24
        $region23: #{tpu_custom_call.1} parent=11 // pred_region
          %s189 = ssub.s32 1024, 1024
          %190 = vsyncadd [#allocation6], %s189
          %s191 = sshll.u32 [#allocation7], 4
          %s192 = int_to_ptr.vmem [resolvable:$true] %s191
          %197 = dma.hbm_to_vmem [thread:$0]  %s3, 1024, %s192, [#allocation6], 64, 64, 4
        $region24: #{tpu_custom_call.1} parent=11 // pred_fallthru
          _
        // Predicated region
        $region25: #{tpu_custom_call.1} parent=11 // pred_check
          %p198 = pneg %p128
        $region26: #{tpu_custom_call.1} parent=11 // pred_check_branch
          %200 = sbr.rel (%p198) target = $region28
        $region27: #{tpu_custom_call.1} parent=11 // pred_region
          _
        $region28: #{tpu_custom_call.1} parent=11 // pred_fallthru
          _
      $region12: #{tpu_custom_call.1} parent=5 // pred_fallthru
        _
      %p201 = scmp.lt.s32.totalorder %s18, 2
      // Predicated region
      $region29: #{tpu_custom_call.1} parent=5 // pred_check
        %p202 = pneg %p201
      $region30: #{tpu_custom_call.1} parent=5 // pred_check_branch
        %204 = sbr.rel (%p202) target = $region32
      $region31: #{tpu_custom_call.1} parent=5 // pred_region
        // Predicated region
        $region33: #{tpu_custom_call.1} parent=31 // pred_check
          %p205 = pneg %p38
        $region34: #{tpu_custom_call.1} parent=31 // pred_check_branch
          %207 = sbr.rel (%p205) target = $region36
        $region35: #{tpu_custom_call.1} parent=31 // pred_region
          %s208 = sand.u32 %s28, 1
          %s209 = scalar_lea.sflag [#allocation3], %s208
          %s210 = sand.u32 %s28, 1
          %s211 = smul.addr %s210, 256
          %s212 = scalar_lea.vmem [#allocation2], %s211
          %s213 = smul.u32 16, %s18
          %s215 = ssub.s32 4096, 4096
          %216 = vsyncadd %s209, %s215
          %s217 = smul.addr %s213, 4
          %s218 = smul.addr %s217, 64
          %s219 = scalar_lea.hbm %s0, %s218
          %s220 = sshll.u32 %s212, 4
          %s221 = int_to_ptr.vmem [resolvable:$true] %s220
          %226 = dma.hbm_to_vmem [thread:$0]  %s219, 4096, %s221, %s209, 256, 256, 16
        $region36: #{tpu_custom_call.1} parent=31 // pred_fallthru
          _
      $region32: #{tpu_custom_call.1} parent=5 // pred_fallthru
        _
      %p227 = scmp.le.s32.totalorder 1, %s18
      %p228 = scmp.lt.s32.totalorder %s18, 3
      %p229 = pnand %p227, %p228
      %p230 = pneg %p229
      // Predicated region
      $region37: #{tpu_custom_call.1} parent=5 // pred_check
        _
      $region38: #{tpu_custom_call.1} parent=5 // pred_check_branch
        %232 = sbr.rel (%p229) target = $region40
      $region39: #{tpu_custom_call.1} parent=5 // pred_region
        %s233 = ssub.s32 %s18, 1
        %s234 = sand.u32 %s31, 1
        %s235 = scalar_lea.sflag [#allocation3], %s234
        %s236 = sand.u32 %s31, 1
        %s237 = smul.addr %s236, 256
        %s238 = scalar_lea.vmem [#allocation2], %s237
        // Predicated region
        $region41: #{tpu_custom_call.1} parent=39 // pred_check
          %p239 = pneg %p44
        $region42: #{tpu_custom_call.1} parent=39 // pred_check_branch
          %241 = sbr.rel (%p239) target = $region44
        $region43: #{tpu_custom_call.1} parent=39 // pred_region
          %242 = dma.done %s235, 4096
        $region44: #{tpu_custom_call.1} parent=39 // pred_fallthru
          _
        // Predicated region
        $region45: #{tpu_custom_call.1} parent=39 // pred_check
          %p243 = pneg %p65
        $region46: #{tpu_custom_call.1} parent=39 // pred_check_branch
          %245 = sbr.rel (%p243) target = $region48
        $region47: #{tpu_custom_call.1} parent=39 // pred_region
          %246 = dma.done [#allocation6], 4096
        $region48: #{tpu_custom_call.1} parent=39 // pred_fallthru
          _
        // Predicated region
        $region49: #{tpu_custom_call.1} parent=39 // pred_check
          %p247 = pneg %p107
        $region50: #{tpu_custom_call.1} parent=39 // pred_check_branch
          %249 = sbr.rel (%p247) target = $region52
        $region51: #{tpu_custom_call.1} parent=39 // pred_region
          %250 = dma.done [#allocation6], 1024
        $region52: #{tpu_custom_call.1} parent=39 // pred_fallthru
          _
        %s251 = sand.u32 %s31, 1
        %s252 = scalar_lea.sflag [#allocation3], %s251
        %s253 = sand.u32 %s31, 1
        %s254 = smul.addr %s253, 256
        %s255 = scalar_lea.vmem [#allocation2], %s254
        %p256 = pneg %p44
        %p257 = pneg %p41
        %p258 = pneg %p65
        %p259 = pneg %p62
        %p260 = pneg %p86
        %p261 = pneg %p83
        %p262 = pneg %p107
        %p263 = pneg %p104
        %p264 = pneg %p128
        %p265 = pneg %p125
        %p266 = pneg %p154
        %p267 = pneg %p151
        %s268 = sand.u32 %s141, 1
        %s269 = scalar_lea.sflag [#allocation4], %s268
        %s270 = sand.u32 %s141, 1
        %s271 = smul.addr %s270, 128
        %s272 = scalar_lea.vmem [#allocation8], %s271
        %s273 = smul.u32 16, %s23
        %s274 = smul.u32 16, %s23
        %v276 = vld [vmem:[%s238] sm:$0xff]
        %v277 = vld [vmem:[%s238 + $0x8] sm:$0xff]
        %v278 = vld [vmem:[%s238 + $0x10] sm:$0xff]
        %v279 = vld [vmem:[%s238 + $0x18] sm:$0xff]
        %v280 = vld [vmem:[%s238 + $0x20] sm:$0xff]
        %v281 = vld [vmem:[%s238 + $0x28] sm:$0xff]
        %v282 = vld [vmem:[%s238 + $0x30] sm:$0xff]
        %v283 = vld [vmem:[%s238 + $0x38] sm:$0xff]
        %v284 = vld [vmem:[%s238 + $0x40] sm:$0xff]
        %v285 = vld [vmem:[%s238 + $0x48] sm:$0xff]
        %v286 = vld [vmem:[%s238 + $0x50] sm:$0xff]
        %v287 = vld [vmem:[%s238 + $0x58] sm:$0xff]
        %v288 = vld [vmem:[%s238 + $0x60] sm:$0xff]
        %v289 = vld [vmem:[%s238 + $0x68] sm:$0xff]
        %v290 = vld [vmem:[%s238 + $0x70] sm:$0xff]
        %v291 = vld [vmem:[%s238 + $0x78] sm:$0xff]
        %v292 = vld [vmem:[%s238 + $0x80] sm:$0xff]
        %v293 = vld [vmem:[%s238 + $0x88] sm:$0xff]
        %v294 = vld [vmem:[%s238 + $0x90] sm:$0xff]
        %v295 = vld [vmem:[%s238 + $0x98] sm:$0xff]
        %v296 = vld [vmem:[%s238 + $0xa0] sm:$0xff]
        %v297 = vld [vmem:[%s238 + $0xa8] sm:$0xff]
        %v298 = vld [vmem:[%s238 + $0xb0] sm:$0xff]
        %v299 = vld [vmem:[%s238 + $0xb8] sm:$0xff]
        %v300 = vld [vmem:[%s238 + $0xc0] sm:$0xff]
        %v301 = vld [vmem:[%s238 + $0xc8] sm:$0xff]
        %v302 = vld [vmem:[%s238 + $0xd0] sm:$0xff]
        %v303 = vld [vmem:[%s238 + $0xd8] sm:$0xff]
        %v304 = vld [vmem:[%s238 + $0xe0] sm:$0xff]
        %v305 = vld [vmem:[%s238 + $0xe8] sm:$0xff]
        %v306 = vld [vmem:[%s238 + $0xf0] sm:$0xff]
        %v307 = vld [vmem:[%s238 + $0xf8] sm:$0xff]
        %v308 = vld [vmem:[#allocation5] sm:$0xf]
        %v309 = vld [vmem:[#allocation5 + $0x4] sm:$0xf]
        %v310 = vld [vmem:[#allocation5 + $0x8] sm:$0xf]
        %v311 = vld [vmem:[#allocation5 + $0xc] sm:$0xf]
        %v312 = vld [vmem:[#allocation5 + $0x10] sm:$0xf]
        %v313 = vld [vmem:[#allocation5 + $0x14] sm:$0xf]
        %v314 = vld [vmem:[#allocation5 + $0x18] sm:$0xf]
        %v315 = vld [vmem:[#allocation5 + $0x1c] sm:$0xf]
        %v316 = vld [vmem:[#allocation5 + $0x20] sm:$0xf]
        %v317 = vld [vmem:[#allocation5 + $0x24] sm:$0xf]
        %v318 = vld [vmem:[#allocation5 + $0x28] sm:$0xf]
        %v319 = vld [vmem:[#allocation5 + $0x2c] sm:$0xf]
        %v320 = vld [vmem:[#allocation5 + $0x30] sm:$0xf]
        %v321 = vld [vmem:[#allocation5 + $0x34] sm:$0xf]
        %v322 = vld [vmem:[#allocation5 + $0x38] sm:$0xf]
        %v323 = vld [vmem:[#allocation5 + $0x3c] sm:$0xf]
        %v324 = vld [vmem:[#allocation5 + $0x40] sm:$0xf]
        %v325 = vld [vmem:[#allocation5 + $0x44] sm:$0xf]
        %v326 = vld [vmem:[#allocation5 + $0x48] sm:$0xf]
        %v327 = vld [vmem:[#allocation5 + $0x4c] sm:$0xf]
        %v328 = vld [vmem:[#allocation5 + $0x50] sm:$0xf]
        %v329 = vld [vmem:[#allocation5 + $0x54] sm:$0xf]
        %v330 = vld [vmem:[#allocation5 + $0x58] sm:$0xf]
        %v331 = vld [vmem:[#allocation5 + $0x5c] sm:$0xf]
        %v332 = vld [vmem:[#allocation5 + $0x60] sm:$0xf]
        %v333 = vld [vmem:[#allocation5 + $0x64] sm:$0xf]
        %v334 = vld [vmem:[#allocation5 + $0x68] sm:$0xf]
        %v335 = vld [vmem:[#allocation5 + $0x6c] sm:$0xf]
        %v336 = vld [vmem:[#allocation5 + $0x70] sm:$0xf]
        %v337 = vld [vmem:[#allocation5 + $0x74] sm:$0xf]
        %v338 = vld [vmem:[#allocation5 + $0x78] sm:$0xf]
        %v339 = vld [vmem:[#allocation5 + $0x7c] sm:$0xf]
        %v340 = vld [vmem:[#allocation5 + $0x80] sm:$0xf]
        %v341 = vld [vmem:[#allocation5 + $0x84] sm:$0xf]
        %v342 = vld [vmem:[#allocation5 + $0x88] sm:$0xf]
        %v343 = vld [vmem:[#allocation5 + $0x8c] sm:$0xf]
        %v344 = vld [vmem:[#allocation5 + $0x90] sm:$0xf]
        %v345 = vld [vmem:[#allocation5 + $0x94] sm:$0xf]
        %v346 = vld [vmem:[#allocation5 + $0x98] sm:$0xf]
        %v347 = vld [vmem:[#allocation5 + $0x9c] sm:$0xf]
        %v348 = vld [vmem:[#allocation5 + $0xa0] sm:$0xf]
        %v349 = vld [vmem:[#allocation5 + $0xa4] sm:$0xf]
        %v350 = vld [vmem:[#allocation5 + $0xa8] sm:$0xf]
        %v351 = vld [vmem:[#allocation5 + $0xac] sm:$0xf]
        %v352 = vld [vmem:[#allocation5 + $0xb0] sm:$0xf]
        %v353 = vld [vmem:[#allocation5 + $0xb4] sm:$0xf]
        %v354 = vld [vmem:[#allocation5 + $0xb8] sm:$0xf]
        %v355 = vld [vmem:[#allocation5 + $0xbc] sm:$0xf]
        %v356 = vld [vmem:[#allocation5 + $0xc0] sm:$0xf]
        %v357 = vld [vmem:[#allocation5 + $0xc4] sm:$0xf]
        %v358 = vld [vmem:[#allocation5 + $0xc8] sm:$0xf]
        %v359 = vld [vmem:[#allocation5 + $0xcc] sm:$0xf]
        %v360 = vld [vmem:[#allocation5 + $0xd0] sm:$0xf]
        %v361 = vld [vmem:[#allocation5 + $0xd4] sm:$0xf]
        %v362 = vld [vmem:[#allocation5 + $0xd8] sm:$0xf]
        %v363 = vld [vmem:[#allocation5 + $0xdc] sm:$0xf]
        %v364 = vld [vmem:[#allocation5 + $0xe0] sm:$0xf]
        %v365 = vld [vmem:[#allocation5 + $0xe4] sm:$0xf]
        %v366 = vld [vmem:[#allocation5 + $0xe8] sm:$0xf]
        %v367 = vld [vmem:[#allocation5 + $0xec] sm:$0xf]
        %v368 = vld [vmem:[#allocation5 + $0xf0] sm:$0xf]
        %v369 = vld [vmem:[#allocation5 + $0xf4] sm:$0xf]
        %v370 = vld [vmem:[#allocation5 + $0xf8] sm:$0xf]
        %v371 = vld [vmem:[#allocation5 + $0xfc] sm:$0xf]
        %v372 = vld [vmem:[%s2] sm:$0x1]
        %v374 = vlaneseq
        %v375 = vshrl.u32 %v374, 7
        %v376 = vsub.s32 0, %v375
        %v377 = vrot.slane %v372, %v376
        %v411 = vunpack.c.l.b16 %v276
        %v412 = vunpack.c.h.b16 %v276
        %v413 = vunpack.c.l.b16 %v277
        %v414 = vunpack.c.h.b16 %v277
        %v415 = vunpack.c.l.b16 %v278
        %v416 = vunpack.c.h.b16 %v278
        %v417 = vunpack.c.l.b16 %v279
        %v418 = vunpack.c.h.b16 %v279
        %v419 = vunpack.c.l.b16 %v280
        %v420 = vunpack.c.h.b16 %v280
        %v421 = vunpack.c.l.b16 %v281
        %v422 = vunpack.c.h.b16 %v281
        %v423 = vunpack.c.l.b16 %v282
        %v424 = vunpack.c.h.b16 %v282
        %v425 = vunpack.c.l.b16 %v283
        %v426 = vunpack.c.h.b16 %v283
        %v427 = vunpack.c.l.b16 %v284
        %v428 = vunpack.c.h.b16 %v284
        %v429 = vunpack.c.l.b16 %v285
        %v430 = vunpack.c.h.b16 %v285
        %v431 = vunpack.c.l.b16 %v286
        %v432 = vunpack.c.h.b16 %v286
        %v433 = vunpack.c.l.b16 %v287
        %v434 = vunpack.c.h.b16 %v287
        %v435 = vunpack.c.l.b16 %v288
        %v436 = vunpack.c.h.b16 %v288
        %v437 = vunpack.c.l.b16 %v289
        %v438 = vunpack.c.h.b16 %v289
        %v439 = vunpack.c.l.b16 %v290
        %v440 = vunpack.c.h.b16 %v290
        %v441 = vunpack.c.l.b16 %v291
        %v442 = vunpack.c.h.b16 %v291
        %v443 = vunpack.c.l.b16 %v292
        %v444 = vunpack.c.h.b16 %v292
        %v445 = vunpack.c.l.b16 %v293
        %v446 = vunpack.c.h.b16 %v293
        %v447 = vunpack.c.l.b16 %v294
        %v448 = vunpack.c.h.b16 %v294
        %v449 = vunpack.c.l.b16 %v295
        %v450 = vunpack.c.h.b16 %v295
        %v451 = vunpack.c.l.b16 %v296
        %v452 = vunpack.c.h.b16 %v296
        %v453 = vunpack.c.l.b16 %v297
        %v454 = vunpack.c.h.b16 %v297
        %v455 = vunpack.c.l.b16 %v298
        %v456 = vunpack.c.h.b16 %v298
        %v457 = vunpack.c.l.b16 %v299
        %v458 = vunpack.c.h.b16 %v299
        %v459 = vunpack.c.l.b16 %v300
        %v460 = vunpack.c.h.b16 %v300
        %v461 = vunpack.c.l.b16 %v301
        %v462 = vunpack.c.h.b16 %v301
        %v463 = vunpack.c.l.b16 %v302
        %v464 = vunpack.c.h.b16 %v302
        %v465 = vunpack.c.l.b16 %v303
        %v466 = vunpack.c.h.b16 %v303
        %v467 = vunpack.c.l.b16 %v304
        %v468 = vunpack.c.h.b16 %v304
        %v469 = vunpack.c.l.b16 %v305
        %v470 = vunpack.c.h.b16 %v305
        %v471 = vunpack.c.l.b16 %v306
        %v472 = vunpack.c.h.b16 %v306
        %v473 = vunpack.c.l.b16 %v307
        %v474 = vunpack.c.h.b16 %v307
        %v475 = vpack.c.b16 %v415, %v411
        %v476 = vpack.c.b16 %v416, %v412
        %v477 = vpack.c.b16 %v417, %v413
        %v478 = vpack.c.b16 %v418, %v414
        %v479 = vpack.c.b16 %v423, %v419
        %v480 = vpack.c.b16 %v424, %v420
        %v481 = vpack.c.b16 %v425, %v421
        %v482 = vpack.c.b16 %v426, %v422
        %v483 = vpack.c.b16 %v431, %v427
        %v484 = vpack.c.b16 %v432, %v428
        %v485 = vpack.c.b16 %v433, %v429
        %v486 = vpack.c.b16 %v434, %v430
        %v487 = vpack.c.b16 %v439, %v435
        %v488 = vpack.c.b16 %v440, %v436
        %v489 = vpack.c.b16 %v441, %v437
        %v490 = vpack.c.b16 %v442, %v438
        %v491 = vpack.c.b16 %v447, %v443
        %v492 = vpack.c.b16 %v448, %v444
        %v493 = vpack.c.b16 %v449, %v445
        %v494 = vpack.c.b16 %v450, %v446
        %v495 = vpack.c.b16 %v455, %v451
        %v496 = vpack.c.b16 %v456, %v452
        %v497 = vpack.c.b16 %v457, %v453
        %v498 = vpack.c.b16 %v458, %v454
        %v499 = vpack.c.b16 %v463, %v459
        %v500 = vpack.c.b16 %v464, %v460
        %v501 = vpack.c.b16 %v465, %v461
        %v502 = vpack.c.b16 %v466, %v462
        %v503 = vpack.c.b16 %v471, %v467
        %v504 = vpack.c.b16 %v472, %v468
        %v505 = vpack.c.b16 %v473, %v469
        %v506 = vpack.c.b16 %v474, %v470
        %v603 = vunpack.c.l.b16 %v308
        %v604 = vunpack.c.l.b16 %v309
        %v605 = vunpack.c.l.b16 %v310
        %v606 = vunpack.c.l.b16 %v311
        %v607 = vunpack.c.l.b16 %v312
        %v608 = vunpack.c.l.b16 %v313
        %v609 = vunpack.c.l.b16 %v314
        %v610 = vunpack.c.l.b16 %v315
        %v611 = vunpack.c.l.b16 %v316
        %v612 = vunpack.c.l.b16 %v317
        %v613 = vunpack.c.l.b16 %v318
        %v614 = vunpack.c.l.b16 %v319
        %v615 = vunpack.c.l.b16 %v320
        %v616 = vunpack.c.l.b16 %v321
        %v617 = vunpack.c.l.b16 %v322
        %v618 = vunpack.c.l.b16 %v323
        %v619 = vunpack.c.l.b16 %v324
        %v620 = vunpack.c.l.b16 %v325
        %v621 = vunpack.c.l.b16 %v326
        %v622 = vunpack.c.l.b16 %v327
        %v623 = vunpack.c.l.b16 %v328
        %v624 = vunpack.c.l.b16 %v329
        %v625 = vunpack.c.l.b16 %v330
        %v626 = vunpack.c.l.b16 %v331
        %v627 = vunpack.c.l.b16 %v332
        %v628 = vunpack.c.l.b16 %v333
        %v629 = vunpack.c.l.b16 %v334
        %v630 = vunpack.c.l.b16 %v335
        %v631 = vunpack.c.l.b16 %v336
        %v632 = vunpack.c.l.b16 %v337
        %v633 = vunpack.c.l.b16 %v338
        %v634 = vunpack.c.l.b16 %v339
        %v635 = vunpack.c.l.b16 %v340
        %v636 = vunpack.c.l.b16 %v341
        %v637 = vunpack.c.l.b16 %v342
        %v638 = vunpack.c.l.b16 %v343
        %v639 = vunpack.c.l.b16 %v344
        %v640 = vunpack.c.l.b16 %v345
        %v641 = vunpack.c.l.b16 %v346
        %v642 = vunpack.c.l.b16 %v347
        %v643 = vunpack.c.l.b16 %v348
        %v644 = vunpack.c.l.b16 %v349
        %v645 = vunpack.c.l.b16 %v350
        %v646 = vunpack.c.l.b16 %v351
        %v647 = vunpack.c.l.b16 %v352
        %v648 = vunpack.c.l.b16 %v353
        %v649 = vunpack.c.l.b16 %v354
        %v650 = vunpack.c.l.b16 %v355
        %v651 = vunpack.c.l.b16 %v356
        %v652 = vunpack.c.l.b16 %v357
        %v653 = vunpack.c.l.b16 %v358
        %v654 = vunpack.c.l.b16 %v359
        %v655 = vunpack.c.l.b16 %v360
        %v656 = vunpack.c.l.b16 %v361
        %v657 = vunpack.c.l.b16 %v362
        %v658 = vunpack.c.l.b16 %v363
        %v659 = vunpack.c.l.b16 %v364
        %v660 = vunpack.c.l.b16 %v365
        %v661 = vunpack.c.l.b16 %v366
        %v662 = vunpack.c.l.b16 %v367
        %v663 = vunpack.c.l.b16 %v368
        %v664 = vunpack.c.l.b16 %v369
        %v665 = vunpack.c.l.b16 %v370
        %v666 = vunpack.c.l.b16 %v371
        %v667 = vpack.c.b16 %v604, %v603
        %v668 = vpack.c.b16 %v606, %v605
        %v669 = vpack.c.b16 %v608, %v607
        %v670 = vpack.c.b16 %v610, %v609
        %v671 = vpack.c.b16 %v612, %v611
        %v672 = vpack.c.b16 %v614, %v613
        %v673 = vpack.c.b16 %v616, %v615
        %v674 = vpack.c.b16 %v618, %v617
        %v675 = vpack.c.b16 %v620, %v619
        %v676 = vpack.c.b16 %v622, %v621
        %v677 = vpack.c.b16 %v624, %v623
        %v678 = vpack.c.b16 %v626, %v625
        %v679 = vpack.c.b16 %v628, %v627
        %v680 = vpack.c.b16 %v630, %v629
        %v681 = vpack.c.b16 %v632, %v631
        %v682 = vpack.c.b16 %v634, %v633
        %v683 = vpack.c.b16 %v636, %v635
        %v684 = vpack.c.b16 %v638, %v637
        %v685 = vpack.c.b16 %v640, %v639
        %v686 = vpack.c.b16 %v642, %v641
        %v687 = vpack.c.b16 %v644, %v643
        %v688 = vpack.c.b16 %v646, %v645
        %v689 = vpack.c.b16 %v648, %v647
        %v690 = vpack.c.b16 %v650, %v649
        %v691 = vpack.c.b16 %v652, %v651
        %v692 = vpack.c.b16 %v654, %v653
        %v693 = vpack.c.b16 %v656, %v655
        %v694 = vpack.c.b16 %v658, %v657
        %v695 = vpack.c.b16 %v660, %v659
        %v696 = vpack.c.b16 %v662, %v661
        %v697 = vpack.c.b16 %v664, %v663
        %v698 = vpack.c.b16 %v666, %v665
        %731 = vmatprep.subr.bf16.mxu0 0
        %732 = vmatpush1.bf16.msra.mxu0 %v674
        %733 = vmatprep.subr.bf16.mxu0 0
        %734 = vmatpush1.bf16.msra.mxu0 %v673
        %735 = vmatprep.subr.bf16.mxu0 0
        %736 = vmatpush1.bf16.msra.mxu0 %v672
        %737 = vmatprep.subr.bf16.mxu0 0
        %738 = vmatpush1.bf16.msra.mxu0 %v671
        %739 = vmatprep.subr.bf16.mxu0 0
        %740 = vmatpush1.bf16.msra.mxu0 %v670
        %741 = vmatprep.subr.bf16.mxu0 0
        %742 = vmatpush1.bf16.msra.mxu0 %v669
        %743 = vmatprep.subr.bf16.mxu0 0
        %744 = vmatpush1.bf16.msra.mxu0 %v668
        %745 = vmatprep.subr.bf16.mxu0 0
        %746 = vmatpush1.bf16.msra.mxu0 %v667
        %747 = vmatprep.subr.bf16.mxu0 0
        %748 = vmatpush2.bf16.msra.mxu0 %v682
        %749 = vmatprep.subr.bf16.mxu0 0
        %750 = vmatpush2.bf16.msra.mxu0 %v681
        %751 = vmatprep.subr.bf16.mxu0 0
        %752 = vmatpush2.bf16.msra.mxu0 %v680
        %753 = vmatprep.subr.bf16.mxu0 0
        %754 = vmatpush2.bf16.msra.mxu0 %v679
        %755 = vmatprep.subr.bf16.mxu0 0
        %756 = vmatpush2.bf16.msra.mxu0 %v678
        %757 = vmatprep.subr.bf16.mxu0 0
        %758 = vmatpush2.bf16.msra.mxu0 %v677
        %759 = vmatprep.subr.bf16.mxu0 0
        %760 = vmatpush2.bf16.msra.mxu0 %v676
        %761 = vmatprep.subr.bf16.mxu0 0
        %762 = vmatpush2.bf16.msra.mxu0 %v675
        %763 = vmatprep.mubr.bf16.mxu0 %v476
        %764 = vmatmul.mubr.bf16.gmra.mxu0 %v475
        %v765 = vpop.f32.mrf.mxu0
        %v766 = vadd.f32 %v377, %v765
        %v767 = vpop.f32.mrf.mxu0
        %v768 = vpop.f32.mrf.mxu0
        %v769 = vadd.f32 %v377, %v768
        %v770 = vpop.f32.mrf.mxu0
        %771 = vmatprep.mubr.bf16.mxu0 %v480
        %772 = vmatmul.mubr.bf16.gmra.mxu0 %v479
        %v773 = vpop.f32.mrf.mxu0
        %v774 = vadd.f32 %v377, %v773
        %v775 = vpop.f32.mrf.mxu0
        %v776 = vpop.f32.mrf.mxu0
        %v777 = vadd.f32 %v377, %v776
        %v778 = vpop.f32.mrf.mxu0
        %779 = vmatprep.mubr.bf16.mxu0 %v484
        %780 = vmatmul.mubr.bf16.gmra.mxu0 %v483
        %v781 = vpop.f32.mrf.mxu0
        %v782 = vadd.f32 %v377, %v781
        %v783 = vpop.f32.mrf.mxu0
        %v784 = vpop.f32.mrf.mxu0
        %v785 = vadd.f32 %v377, %v784
        %v786 = vpop.f32.mrf.mxu0
        %787 = vmatprep.mubr.bf16.mxu0 %v488
        %788 = vmatmul.mubr.bf16.gmra.mxu0 %v487
        %v789 = vpop.f32.mrf.mxu0
        %v790 = vadd.f32 %v377, %v789
        %v791 = vpop.f32.mrf.mxu0
        %v792 = vpop.f32.mrf.mxu0
        %v793 = vadd.f32 %v377, %v792
        %v794 = vpop.f32.mrf.mxu0
        %795 = vmatprep.mubr.bf16.mxu0 %v492
        %796 = vmatmul.mubr.bf16.gmra.mxu0 %v491
        %v797 = vpop.f32.mrf.mxu0
        %v798 = vadd.f32 %v377, %v797
        %v799 = vpop.f32.mrf.mxu0
        %v800 = vpop.f32.mrf.mxu0
        %v801 = vadd.f32 %v377, %v800
        %v802 = vpop.f32.mrf.mxu0
        %803 = vmatprep.mubr.bf16.mxu0 %v496
        %804 = vmatmul.mubr.bf16.gmra.mxu0 %v495
        %v805 = vpop.f32.mrf.mxu0
        %v806 = vadd.f32 %v377, %v805
        %v807 = vpop.f32.mrf.mxu0
        %v808 = vpop.f32.mrf.mxu0
        %v809 = vadd.f32 %v377, %v808
        %v810 = vpop.f32.mrf.mxu0
        %811 = vmatprep.mubr.bf16.mxu0 %v500
        %812 = vmatmul.mubr.bf16.gmra.mxu0 %v499
        %v813 = vpop.f32.mrf.mxu0
        %v814 = vadd.f32 %v377, %v813
        %v815 = vpop.f32.mrf.mxu0
        %v816 = vpop.f32.mrf.mxu0
        %v817 = vadd.f32 %v377, %v816
        %v818 = vpop.f32.mrf.mxu0
        %819 = vmatprep.mubr.bf16.mxu0 %v504
        %820 = vmatmul.mubr.bf16.gmra.mxu0 %v503
        %v821 = vpop.f32.mrf.mxu0
        %v822 = vadd.f32 %v377, %v821
        %v823 = vpop.f32.mrf.mxu0
        %v824 = vpop.f32.mrf.mxu0
        %v825 = vadd.f32 %v377, %v824
        %v826 = vpop.f32.mrf.mxu0
        %827 = vdwg.mxu0
        %828 = vmatprep.subr.bf16.mxu0 0
        %829 = vmatpush1.bf16.msra.mxu0 %v690
        %830 = vmatprep.subr.bf16.mxu0 0
        %831 = vmatpush1.bf16.msra.mxu0 %v689
        %832 = vmatprep.subr.bf16.mxu0 0
        %833 = vmatpush1.bf16.msra.mxu0 %v688
        %834 = vmatprep.subr.bf16.mxu0 0
        %835 = vmatpush1.bf16.msra.mxu0 %v687
        %836 = vmatprep.subr.bf16.mxu0 0
        %837 = vmatpush1.bf16.msra.mxu0 %v686
        %838 = vmatprep.subr.bf16.mxu0 0
        %839 = vmatpush1.bf16.msra.mxu0 %v685
        %840 = vmatprep.subr.bf16.mxu0 0
        %841 = vmatpush1.bf16.msra.mxu0 %v684
        %842 = vmatprep.subr.bf16.mxu0 0
        %843 = vmatpush1.bf16.msra.mxu0 %v683
        %844 = vmatprep.subr.bf16.mxu0 0
        %845 = vmatpush2.bf16.msra.mxu0 %v698
        %846 = vmatprep.subr.bf16.mxu0 0
        %847 = vmatpush2.bf16.msra.mxu0 %v697
        %848 = vmatprep.subr.bf16.mxu0 0
        %849 = vmatpush2.bf16.msra.mxu0 %v696
        %850 = vmatprep.subr.bf16.mxu0 0
        %851 = vmatpush2.bf16.msra.mxu0 %v695
        %852 = vmatprep.subr.bf16.mxu0 0
        %853 = vmatpush2.bf16.msra.mxu0 %v694
        %854 = vmatprep.subr.bf16.mxu0 0
        %855 = vmatpush2.bf16.msra.mxu0 %v693
        %856 = vmatprep.subr.bf16.mxu0 0
        %857 = vmatpush2.bf16.msra.mxu0 %v692
        %858 = vmatprep.subr.bf16.mxu0 0
        %859 = vmatpush2.bf16.msra.mxu0 %v691
        %860 = vmatprep.mubr.bf16.mxu0 %v478
        %861 = vmatmul.mubr.bf16.gmra.mxu0 %v477
        %v862 = vpop.f32.mrf.mxu0
        %v863 = vadd.f32 %v766, %v862
        %v864 = vpop.f32.mrf.mxu0
        %v865 = vpop.f32.mrf.mxu0
        %v866 = vadd.f32 %v769, %v865
        %v867 = vpop.f32.mrf.mxu0
        %868 = vmatprep.mubr.bf16.mxu0 %v482
        %869 = vmatmul.mubr.bf16.gmra.mxu0 %v481
        %v870 = vpop.f32.mrf.mxu0
        %v871 = vadd.f32 %v774, %v870
        %v872 = vpop.f32.mrf.mxu0
        %v873 = vpop.f32.mrf.mxu0
        %v874 = vadd.f32 %v777, %v873
        %v875 = vpop.f32.mrf.mxu0
        %876 = vmatprep.mubr.bf16.mxu0 %v486
        %877 = vmatmul.mubr.bf16.gmra.mxu0 %v485
        %v878 = vpop.f32.mrf.mxu0
        %v879 = vadd.f32 %v782, %v878
        %v880 = vpop.f32.mrf.mxu0
        %v881 = vpop.f32.mrf.mxu0
        %v882 = vadd.f32 %v785, %v881
        %v883 = vpop.f32.mrf.mxu0
        %884 = vmatprep.mubr.bf16.mxu0 %v490
        %885 = vmatmul.mubr.bf16.gmra.mxu0 %v489
        %v886 = vpop.f32.mrf.mxu0
        %v887 = vadd.f32 %v790, %v886
        %v888 = vpop.f32.mrf.mxu0
        %v889 = vpop.f32.mrf.mxu0
        %v890 = vadd.f32 %v793, %v889
        %v891 = vpop.f32.mrf.mxu0
        %892 = vmatprep.mubr.bf16.mxu0 %v494
        %893 = vmatmul.mubr.bf16.gmra.mxu0 %v493
        %v894 = vpop.f32.mrf.mxu0
        %v895 = vadd.f32 %v798, %v894
        %v896 = vpop.f32.mrf.mxu0
        %v897 = vpop.f32.mrf.mxu0
        %v898 = vadd.f32 %v801, %v897
        %v899 = vpop.f32.mrf.mxu0
        %900 = vmatprep.mubr.bf16.mxu0 %v498
        %901 = vmatmul.mubr.bf16.gmra.mxu0 %v497
        %v902 = vpop.f32.mrf.mxu0
        %v903 = vadd.f32 %v806, %v902
        %v904 = vpop.f32.mrf.mxu0
        %v905 = vpop.f32.mrf.mxu0
        %v906 = vadd.f32 %v809, %v905
        %v907 = vpop.f32.mrf.mxu0
        %908 = vmatprep.mubr.bf16.mxu0 %v502
        %909 = vmatmul.mubr.bf16.gmra.mxu0 %v501
        %v910 = vpop.f32.mrf.mxu0
        %v911 = vadd.f32 %v814, %v910
        %v912 = vpop.f32.mrf.mxu0
        %v913 = vpop.f32.mrf.mxu0
        %v914 = vadd.f32 %v817, %v913
        %v915 = vpop.f32.mrf.mxu0
        %916 = vmatprep.mubr.bf16.mxu0 %v506
        %917 = vmatmul.mubr.bf16.gmra.mxu0 %v505
        %v918 = vpop.f32.mrf.mxu0
        %v919 = vadd.f32 %v822, %v918
        %v920 = vpop.f32.mrf.mxu0
        %v921 = vpop.f32.mrf.mxu0
        %v922 = vadd.f32 %v825, %v921
        %v923 = vpop.f32.mrf.mxu0
        %924 = vdwg.mxu0
        %v925 = vmax.f32 %v863, 0.0
        %v926 = vmax.f32 %v866, 0.0
        %v927 = vmax.f32 %v871, 0.0
        %v928 = vmax.f32 %v874, 0.0
        %v929 = vmax.f32 %v879, 0.0
        %v930 = vmax.f32 %v882, 0.0
        %v931 = vmax.f32 %v887, 0.0
        %v932 = vmax.f32 %v890, 0.0
        %v933 = vmax.f32 %v895, 0.0
        %v934 = vmax.f32 %v898, 0.0
        %v935 = vmax.f32 %v903, 0.0
        %v936 = vmax.f32 %v906, 0.0
        %v937 = vmax.f32 %v911, 0.0
        %v938 = vmax.f32 %v914, 0.0
        %v939 = vmax.f32 %v919, 0.0
        %v940 = vmax.f32 %v922, 0.0
        %v941 = vpack.c.bf16 %v926, %v925
        %v942 = vpack.c.bf16 %v928, %v927
        %v943 = vpack.c.bf16 %v930, %v929
        %v944 = vpack.c.bf16 %v932, %v931
        %v945 = vpack.c.bf16 %v934, %v933
        %v946 = vpack.c.bf16 %v936, %v935
        %v947 = vpack.c.bf16 %v938, %v937
        %v948 = vpack.c.bf16 %v940, %v939
        %v949 = vld [vmem:[#allocation7] sm:$0xf]
        %v950 = vld [vmem:[#allocation7 + $0x4] sm:$0xf]
        %v951 = vld [vmem:[#allocation7 + $0x8] sm:$0xf]
        %v952 = vld [vmem:[#allocation7 + $0xc] sm:$0xf]
        %v953 = vld [vmem:[#allocation7 + $0x10] sm:$0xf]
        %v954 = vld [vmem:[#allocation7 + $0x14] sm:$0xf]
        %v955 = vld [vmem:[#allocation7 + $0x18] sm:$0xf]
        %v956 = vld [vmem:[#allocation7 + $0x1c] sm:$0xf]
        %v957 = vld [vmem:[#allocation7 + $0x20] sm:$0xf]
        %v958 = vld [vmem:[#allocation7 + $0x24] sm:$0xf]
        %v959 = vld [vmem:[#allocation7 + $0x28] sm:$0xf]
        %v960 = vld [vmem:[#allocation7 + $0x2c] sm:$0xf]
        %v961 = vld [vmem:[#allocation7 + $0x30] sm:$0xf]
        %v962 = vld [vmem:[#allocation7 + $0x34] sm:$0xf]
        %v963 = vld [vmem:[#allocation7 + $0x38] sm:$0xf]
        %v964 = vld [vmem:[#allocation7 + $0x3c] sm:$0xf]
        %v965 = vld [vmem:[%s4] sm:$0x1]
        %v967 = vlaneseq
        %v968 = vshrl.u32 %v967, 7
        %v969 = vsub.s32 0, %v968
        %v970 = vrot.slane %v965, %v969
        %v988 = vunpack.c.l.b16 %v949
        %v989 = vunpack.c.l.b16 %v950
        %v990 = vunpack.c.l.b16 %v951
        %v991 = vunpack.c.l.b16 %v952
        %v992 = vunpack.c.l.b16 %v953
        %v993 = vunpack.c.l.b16 %v954
        %v994 = vunpack.c.l.b16 %v955
        %v995 = vunpack.c.l.b16 %v956
        %v996 = vunpack.c.l.b16 %v957
        %v997 = vunpack.c.l.b16 %v958
        %v998 = vunpack.c.l.b16 %v959
        %v999 = vunpack.c.l.b16 %v960
        %v1000 = vunpack.c.l.b16 %v961
        %v1001 = vunpack.c.l.b16 %v962
        %v1002 = vunpack.c.l.b16 %v963
        %v1003 = vunpack.c.l.b16 %v964
        %v1004 = vpack.c.b16 %v989, %v988
        %v1005 = vpack.c.b16 %v991, %v990
        %v1006 = vpack.c.b16 %v993, %v992
        %v1007 = vpack.c.b16 %v995, %v994
        %v1008 = vpack.c.b16 %v997, %v996
        %v1009 = vpack.c.b16 %v999, %v998
        %v1010 = vpack.c.b16 %v1001, %v1000
        %v1011 = vpack.c.b16 %v1003, %v1002
        %1020 = vmatprep.subr.bf16.mxu0 0
        %1021 = vmatpush1.bf16.msra.mxu0 %v1011
        %1022 = vmatprep.subr.bf16.mxu0 0
        %1023 = vmatpush1.bf16.msra.mxu0 %v1010
        %1024 = vmatprep.subr.bf16.mxu0 0
        %1025 = vmatpush1.bf16.msra.mxu0 %v1009
        %1026 = vmatprep.subr.bf16.mxu0 0
        %1027 = vmatpush1.bf16.msra.mxu0 %v1008
        %1028 = vmatprep.subr.bf16.mxu0 0
        %1029 = vmatpush1.bf16.msra.mxu0 %v1007
        %1030 = vmatprep.subr.bf16.mxu0 0
        %1031 = vmatpush1.bf16.msra.mxu0 %v1006
        %1032 = vmatprep.subr.bf16.mxu0 0
        %1033 = vmatpush1.bf16.msra.mxu0 %v1005
        %1034 = vmatprep.subr.bf16.mxu0 0
        %1035 = vmatpush1.bf16.msra.mxu0 %v1004
        %1036 = vmatprep.subr.bf16.mxu0 0
        %1037 = vmatpush2.bf16.msra.mxu0 0
        %1038 = vmatprep.subr.bf16.mxu0 0
        %1039 = vmatpush2.bf16.msra.mxu0 0
        %1040 = vmatprep.subr.bf16.mxu0 0
        %1041 = vmatpush2.bf16.msra.mxu0 0
        %1042 = vmatprep.subr.bf16.mxu0 0
        %1043 = vmatpush2.bf16.msra.mxu0 0
        %1044 = vmatprep.subr.bf16.mxu0 0
        %1045 = vmatpush2.bf16.msra.mxu0 0
        %1046 = vmatprep.subr.bf16.mxu0 0
        %1047 = vmatpush2.bf16.msra.mxu0 0
        %1048 = vmatprep.subr.bf16.mxu0 0
        %1049 = vmatpush2.bf16.msra.mxu0 0
        %1050 = vmatprep.subr.bf16.mxu0 0
        %1051 = vmatpush2.bf16.msra.mxu0 0
        %1052 = vmatprep.mubr.bf16.mxu0 0
        %1053 = vmatmul.mubr.bf16.gmra.mxu0 %v941
        %v1054 = vpop.f32.mrf.mxu0
        %v1055 = vadd.f32 %v970, %v1054
        %v1056 = vpop.f32.mrf.mxu0
        %v1057 = vpop.f32.mrf.mxu0
        %v1058 = vadd.f32 %v970, %v1057
        %v1059 = vpop.f32.mrf.mxu0
        %1060 = vmatprep.mubr.bf16.mxu0 0
        %1061 = vmatmul.mubr.bf16.gmra.mxu0 %v942
        %v1062 = vpop.f32.mrf.mxu0
        %v1063 = vadd.f32 %v970, %v1062
        %v1064 = vpop.f32.mrf.mxu0
        %v1065 = vpop.f32.mrf.mxu0
        %v1066 = vadd.f32 %v970, %v1065
        %v1067 = vpop.f32.mrf.mxu0
        %1068 = vmatprep.mubr.bf16.mxu0 0
        %1069 = vmatmul.mubr.bf16.gmra.mxu0 %v943
        %v1070 = vpop.f32.mrf.mxu0
        %v1071 = vadd.f32 %v970, %v1070
        %v1072 = vpop.f32.mrf.mxu0
        %v1073 = vpop.f32.mrf.mxu0
        %v1074 = vadd.f32 %v970, %v1073
        %v1075 = vpop.f32.mrf.mxu0
        %1076 = vmatprep.mubr.bf16.mxu0 0
        %1077 = vmatmul.mubr.bf16.gmra.mxu0 %v944
        %v1078 = vpop.f32.mrf.mxu0
        %v1079 = vadd.f32 %v970, %v1078
        %v1080 = vpop.f32.mrf.mxu0
        %v1081 = vpop.f32.mrf.mxu0
        %v1082 = vadd.f32 %v970, %v1081
        %v1083 = vpop.f32.mrf.mxu0
        %1084 = vmatprep.mubr.bf16.mxu0 0
        %1085 = vmatmul.mubr.bf16.gmra.mxu0 %v945
        %v1086 = vpop.f32.mrf.mxu0
        %v1087 = vadd.f32 %v970, %v1086
        %v1088 = vpop.f32.mrf.mxu0
        %v1089 = vpop.f32.mrf.mxu0
        %v1090 = vadd.f32 %v970, %v1089
        %v1091 = vpop.f32.mrf.mxu0
        %1092 = vmatprep.mubr.bf16.mxu0 0
        %1093 = vmatmul.mubr.bf16.gmra.mxu0 %v946
        %v1094 = vpop.f32.mrf.mxu0
        %v1095 = vadd.f32 %v970, %v1094
        %v1096 = vpop.f32.mrf.mxu0
        %v1097 = vpop.f32.mrf.mxu0
        %v1098 = vadd.f32 %v970, %v1097
        %v1099 = vpop.f32.mrf.mxu0
        %1100 = vmatprep.mubr.bf16.mxu0 0
        %1101 = vmatmul.mubr.bf16.gmra.mxu0 %v947
        %v1102 = vpop.f32.mrf.mxu0
        %v1103 = vadd.f32 %v970, %v1102
        %v1104 = vpop.f32.mrf.mxu0
        %v1105 = vpop.f32.mrf.mxu0
        %v1106 = vadd.f32 %v970, %v1105
        %v1107 = vpop.f32.mrf.mxu0
        %1108 = vmatprep.mubr.bf16.mxu0 0
        %1109 = vmatmul.mubr.bf16.gmra.mxu0 %v948
        %v1110 = vpop.f32.mrf.mxu0
        %v1111 = vadd.f32 %v970, %v1110
        %v1112 = vpop.f32.mrf.mxu0
        %v1113 = vpop.f32.mrf.mxu0
        %v1114 = vadd.f32 %v970, %v1113
        %v1115 = vpop.f32.mrf.mxu0
        %1116 = vdwg.mxu0
        %1117 = vst [vmem:[%s272] sm:$0xff] %v1055
        %1118 = vst [vmem:[%s272 + $0x8] sm:$0xff] %v1058
        %1119 = vst [vmem:[%s272 + $0x10] sm:$0xff] %v1063
        %1120 = vst [vmem:[%s272 + $0x18] sm:$0xff] %v1066
        %1121 = vst [vmem:[%s272 + $0x20] sm:$0xff] %v1071
        %1122 = vst [vmem:[%s272 + $0x28] sm:$0xff] %v1074
        %1123 = vst [vmem:[%s272 + $0x30] sm:$0xff] %v1079
        %1124 = vst [vmem:[%s272 + $0x38] sm:$0xff] %v1082
        %1125 = vst [vmem:[%s272 + $0x40] sm:$0xff] %v1087
        %1126 = vst [vmem:[%s272 + $0x48] sm:$0xff] %v1090
        %1127 = vst [vmem:[%s272 + $0x50] sm:$0xff] %v1095
        %1128 = vst [vmem:[%s272 + $0x58] sm:$0xff] %v1098
        %1129 = vst [vmem:[%s272 + $0x60] sm:$0xff] %v1103
        %1130 = vst [vmem:[%s272 + $0x68] sm:$0xff] %v1106
        %1131 = vst [vmem:[%s272 + $0x70] sm:$0xff] %v1111
        %1132 = vst [vmem:[%s272 + $0x78] sm:$0xff] %v1114
        %s1133 = sand.u32 %s141, 1
        %s1134 = scalar_lea.sflag [#allocation4], %s1133
        %s1135 = sand.u32 %s141, 1
        %s1136 = smul.addr %s1135, 128
        %s1137 = scalar_lea.vmem [#allocation8], %s1136
        // Predicated region
        $region53: #{tpu_custom_call.1} parent=39 // pred_check
          %p1138 = pneg %p151
        $region54: #{tpu_custom_call.1} parent=39 // pred_check_branch
          %1140 = sbr.rel (%p1138) target = $region56
        $region55: #{tpu_custom_call.1} parent=39 // pred_region
          %s1141 = smul.u32 16, %s23
          %s1143 = ssub.s32 2048, 2048
          %1144 = vsyncadd %s1134, %s1143
          %s1145 = smul.addr %s1141, 128
          %s1146 = scalar_lea.hbm %s5, %s1145
          %s1147 = sshll.u32 %s1137, 4
          %s1148 = int_to_ptr.vmem [resolvable:$true] %s1147
          %1153 = dma.vmem_to_hbm [thread:$0]  %s1148, 2048, %s1146, %s1134, 128, 128, 8
        $region56: #{tpu_custom_call.1} parent=39 // pred_fallthru
          _
      $region40: #{tpu_custom_call.1} parent=5 // pred_fallthru
        _
      %p1154 = scmp.le.s32.totalorder 2, %s18
      // Predicated region
      $region57: #{tpu_custom_call.1} parent=5 // pred_check
        %p1155 = pneg %p1154
      $region58: #{tpu_custom_call.1} parent=5 // pred_check_branch
        %1157 = sbr.rel (%p1155) target = $region60
      $region59: #{tpu_custom_call.1} parent=5 // pred_region
        %s1158 = ssub.s32 %s18, 2
        // Predicated region
        $region61: #{tpu_custom_call.1} parent=59 // pred_check
          %p1159 = pneg %p157
        $region62: #{tpu_custom_call.1} parent=59 // pred_check_branch
          %1161 = sbr.rel (%p1159) target = $region64
        $region63: #{tpu_custom_call.1} parent=59 // pred_region
          %s1162 = sand.u32 %s142, 1
          %s1163 = scalar_lea.sflag [#allocation4], %s1162
          %s1164 = sand.u32 %s142, 1
          %s1165 = smul.addr %s1164, 128
          %s1166 = scalar_lea.vmem [#allocation8], %s1165
          %1167 = dma.done %s1163, 2048
        $region64: #{tpu_custom_call.1} parent=59 // pred_fallthru
          _
      $region60: #{tpu_custom_call.1} parent=5 // pred_fallthru
        _
    $region6: #{tpu_custom_call.1} parent=1 // loop_footer
      %s22 = sadd.s32 1, %s18
    $region7: #{tpu_custom_call.1} parent=1 // loop_footer_branch
      %17 = sbr.rel target = $region3
    $region8: #{tpu_custom_call.1} parent=1 // loop_exit
      _
    %1168 = vsyncpa [#allocation3], 1
    %s1169 = scalar_lea.sflag [#allocation3], 1
    %1170 = vsyncpa %s1169, 1
    %1171 = vsyncpa [#allocation6], 1
    %1172 = vsyncpa [#allocation4], 1
    %s1173 = scalar_lea.sflag [#allocation4], 1
    %1174 = vsyncpa %s1173, 1

</llo_original>
